<compile_context>
chip_gen: v7x
topology: tpu7x:2x2x1
jax: 0.10.0
libtpu: 0.0.40
codegen_flags: <defaults>
</compile_context>

<pallas_src>
import math

import jax
import jax.numpy as jnp
from jax.experimental import pallas as pl
from jax.experimental.pallas import tpu as pltpu


def _feature_mask_kernel(w_ref, x_ref, o_ref):
    # w_ref: (1, tile_d) resident weight slab; x_ref/o_ref: (tile_b, tile_d)
    # streaming tiles.  Product promotes per jnp rules (matches torch).
    prod = w_ref[...] * x_ref[...]
    o_ref[...] = jnp.maximum(prod, jnp.zeros((), prod.dtype)).astype(o_ref.dtype)


def _cdiv(a: int, b: int) -> int:
    return -(-a // b)


def _round_up(n: int, m: int) -> int:
    return _cdiv(n, m) * m


def _sublane_multiple(dtype) -> int:
    # f32 -> 8, bf16/f16 -> 16, int8/fp8 -> 32 (packed sublane rows).
    itemsize = jnp.dtype(dtype).itemsize
    if itemsize in (1, 2, 4):
        return 8 * (4 // itemsize)
    return 8


def _vmem_capacity_bytes() -> int:
    try:
        return int(pltpu.get_tpu_info().vmem_capacity_bytes)
    except Exception:
        return 64 * 1024 * 1024  # conservative: v7x per-TC VMEM


def feature_mask_forward(x, weight, *, tile_b=None, vmem_budget_bytes=None,
                         tile_target_bytes=4 * 1024 * 1024, donate_x=False):
    """ReLU(weight * x) with weight (input_dim,) broadcast over leading axes of x."""
    assert x.shape[-1] == weight.shape[0], "x last dim must equal input_dim"

    orig_shape = x.shape
    D = int(weight.shape[0])
    x2 = x.reshape(-1, D)
    B = int(x2.shape[0])

    # Match torch promotion: f32 weight * bf16 x -> f32 result.
    out_dtype = jnp.promote_types(x.dtype, weight.dtype)
    w2 = weight

    # ---- Lane folding for small / non-128-multiple feature dims --------------
    # Fold k consecutive rows into the lane axis (free, contiguous reshape) so
    # stores are wide unmasked vst instead of masked vst.msk partial stores.
    # Only when B divides evenly, so no padding is reintroduced.
    B_eff, D_eff = B, D
    if D % 128 != 0:
        k = 128 // math.gcd(D, 128)
        if k > 1 and B >= k and B % k == 0:
            B_eff, D_eff = B // k, D * k
            x2 = x2.reshape(B_eff, D_eff)
            w2 = jnp.tile(weight, k)

    x_item = jnp.dtype(x.dtype).itemsize
    o_item = jnp.dtype(out_dtype).itemsize
    w_item = jnp.dtype(w2.dtype).itemsize
    max_item = max(x_item, o_item)
    sub = max(_sublane_multiple(x.dtype), _sublane_multiple(out_dtype))

    # ---- Generation-aware VMEM budget & per-buffer target --------------------
    vmem_cap = _vmem_capacity_bytes()
    if vmem_budget_bytes is None:
        # ~48 MiB on v7x (64 MiB physical), ~96 MiB on v5e/v6e (128 MiB).
        vmem_budget_bytes = min(int(0.75 * vmem_cap), 100 * 1024 * 1024)
    vmem_budget_bytes = min(int(vmem_budget_bytes), int(0.8 * vmem_cap))
    per_buffer = max(min(vmem_budget_bytes // 4, int(tile_target_bytes)),
                     sub * 128 * max_item)

    # ---- Feature-axis tiling (only for very wide D) ---------------------------
    if sub * D_eff * max_item > per_buffer and D_eff % 128 == 0:
        tile_d = max(128, (per_buffer // (sub * max_item) // 128) * 128)
        tile_d = min(tile_d, D_eff)
    else:
        # Full-width lane-dense block.  (If D is huge AND not a multiple of
        # 128 we keep full width and let the VMEM limit grow - rare case.)
        tile_d = D_eff
    n_d = _cdiv(D_eff, tile_d)

    # ---- Batch tile: byte-based target, never larger than the batch ----------
    row_bytes = tile_d * max_item
    auto_tile = tile_b is None
    if auto_tile:
        tile_b = max(sub, per_buffer // row_bytes)
    tile_b = max(sub, (int(tile_b) // sub) * sub)
    tile_b = min(tile_b, _round_up(B_eff, sub))

    # ---- Megacore: make sure the grid has enough steps for 2 TCs (v7x) -------
    if auto_tile:
        desired_steps = 4                      # >=2 required, 4+ preferred
        desired_b = max(1, _cdiv(desired_steps, n_d))
        if _cdiv(B_eff, tile_b) < desired_b:
            tile_b = max(sub, _round_up(_cdiv(B_eff, desired_b), sub))
    n_b = _cdiv(B_eff, tile_b)

    # ---- VMEM limit from the actual double-buffered footprint + headroom -----
    footprint = 2 * (tile_b * tile_d * x_item      # x (double-buffered)
                     + tile_b * tile_d * o_item    # out
                     + tile_d * w_item)            # resident weight slab
    vmem_limit = int(footprint * 1.25) + (2 << 20)
    vmem_limit = min(max(vmem_limit, 16 * 1024 * 1024), int(0.9 * vmem_cap))

    w2d = w2.reshape(1, D_eff)

    extra_kwargs = {}
    if donate_x and jnp.dtype(x.dtype) == jnp.dtype(out_dtype):
        # Alias x -> out: halves HBM footprint for callers that donate x.
        extra_kwargs["input_output_aliases"] = {1: 0}

    out = pl.pallas_call(
        _feature_mask_kernel,
        out_shape=jax.ShapeDtypeStruct((B_eff, D_eff), out_dtype),
        grid_spec=pltpu.PrefetchScalarGridSpec(
            num_scalar_prefetch=0,
            grid=(n_b, n_d),
            in_specs=[
                # Weight: constant batch block index -> stays resident in VMEM.
                pl.BlockSpec((1, tile_d), lambda i, j: (0, j)),
                # x: lane-dense streaming tiles; partial last blocks are masked
                # by Pallas (no host-side pad / slice needed).
                pl.BlockSpec((tile_b, tile_d), lambda i, j: (i, j)),
            ],
            out_specs=pl.BlockSpec((tile_b, tile_d), lambda i, j: (i, j)),
        ),
        compiler_params=pltpu.CompilerParams(
            # Both axes independent: megacore/2-TC sharding on v7x, plain
            # sequential streaming loop on v5e/v6e.
            dimension_semantics=("parallel", "parallel"),
            vmem_limit_bytes=vmem_limit,
        ),
        **extra_kwargs,
    )(w2d, x2)

    return out.reshape(orig_shape)


if __name__ == "__main__":
    key = jax.random.PRNGKey(0)
    k_w, k_x1, k_x2, k_w3, k_x3 = jax.random.split(key, 5)

    # --- Case 1: lane-friendly feature dim (multiple of 128), small batch -----
    D = 256
    weight = jax.random.uniform(k_w, (D,), dtype=jnp.float32)  # ~ torch.rand(D)
    x1 = jax.random.normal(k_x1, (16, D), dtype=jnp.float32)
    out1 = jax.block_until_ready(feature_mask_forward(x1, weight))
    ref1 = jnp.maximum(weight[None, :] * x1, 0.0)
    assert out1.shape == x1.shape
    assert jnp.allclose(out1, ref1, atol=1e-6), "mismatch vs reference (batch=16)"

    # --- Case 2: ragged batch -> masked partial last block, no pad/slice ------
    x2 = jax.random.normal(k_x2, (50, D), dtype=jnp.float32)
    out2 = jax.block_until_ready(feature_mask_forward(x2, weight))
    ref2 = jnp.maximum(weight[None, :] * x2, 0.0)
    assert out2.shape == x2.shape
    assert jnp.allclose(out2, ref2, atol=1e-6), "mismatch vs reference (batch=50)"

    # --- Case 3: small non-128-multiple D + extra leading axes (lane folding) -
    D3 = 32
    weight3 = jax.random.uniform(k_w3, (D3,), dtype=jnp.float32)
    x3 = jax.random.normal(k_x3, (2, 4, D3), dtype=jnp.float32)  # B=8, fold k=4
    out3 = jax.block_until_ready(feature_mask_forward(x3, weight3))
    ref3 = jnp.maximum(weight3 * x3, 0.0)
    assert out3.shape == x3.shape
    assert jnp.allclose(out3, ref3, atol=1e-6), "mismatch vs reference (folded D=32)"

    print("KERNEL_OK")
</pallas_src>

<mosaic_0001>
module attributes {stable_mosaic.version = 11 : i64} {
  func.func @_feature_mask_kernel(%arg0: i32, %arg1: i32, %arg2: memref<1x256xf32, #tpu.memory_space<vmem>>, %arg3: memref<8x256xf32, #tpu.memory_space<vmem>>, %arg4: memref<8x256xf32, #tpu.memory_space<vmem>>) attributes {dimension_semantics = [#tpu.dimension_semantics<parallel>, #tpu.dimension_semantics<parallel>], iteration_bounds = array<i64: 2, 1>, scalar_prefetch = 0 : i64, scratch_operands = 0 : i64, tpu.core_type = #tpu.core_type<tc>, window_params = [{transform_indices = @transform_0, window_bounds = array<i64: 1, 256>}, {transform_indices = @transform_1, window_bounds = array<i64: 8, 256>}, {transform_indices = @transform_2, window_bounds = array<i64: 8, 256>}]} {
    %c0 = arith.constant 0 : index
    %c0_0 = arith.constant 0 : index
    %0 = vector.load %arg2[%c0, %c0_0] : memref<1x256xf32, #tpu.memory_space<vmem>>, vector<1x256xf32>
    %c0_1 = arith.constant 0 : index
    %c0_2 = arith.constant 0 : index
    %1 = vector.load %arg3[%c0_1, %c0_2] : memref<8x256xf32, #tpu.memory_space<vmem>>, vector<8x256xf32>
    %2 = vector.broadcast %0 : vector<1x256xf32> to vector<8x256xf32>
    %3 = arith.mulf %2, %1 : vector<8x256xf32>
    %cst = arith.constant 0.000000e+00 : f32
    %4 = vector.broadcast %cst : f32 to vector<8x256xf32>
    %5 = arith.maximumf %3, %4 : vector<8x256xf32>
    %c0_3 = arith.constant 0 : index
    %c0_4 = arith.constant 0 : index
    %6 = vector.load %arg4[%c0_3, %c0_4] : memref<8x256xf32, #tpu.memory_space<vmem>>, vector<8x256xf32>
    tpu.vector_store %arg4[%c0_3, %c0_4], %5 {strides = array<i32>} : memref<8x256xf32, #tpu.memory_space<vmem>>, vector<8x256xf32>,
    return
  }
  func.func @transform_0(%arg0: i32, %arg1: i32) -> (i32, i32) {
    %c0_i32 = arith.constant 0 : i32
    %c0_i32_0 = arith.constant 0 : i32
    return %c0_i32, %arg1 : i32, i32
  }
  func.func @transform_1(%arg0: i32, %arg1: i32) -> (i32, i32) {
    %c0_i32 = arith.constant 0 : i32
    return %arg0, %arg1 : i32, i32
  }
  func.func @transform_2(%arg0: i32, %arg1: i32) -> (i32, i32) {
    %c0_i32 = arith.constant 0 : i32
    return %arg0, %arg1 : i32, i32
  }
}

</mosaic_0001>

<llo_original>
// kernel: tpu_custom_call.1
$region0: #{tpu_custom_call.1}
  #allocation0 [shape = 'u32[]', space=smem, size = 0x4, offset = 0x4, fixed_abs, tag = 'smem constant byte address 0x4 - core index']
  #allocation1 [shape = 'u32[144,128]{1,0:T(1,128)}', space=vmem, size = 0x12000, scoped, tag = 'internal scratch']
  %s0 = inlined_call_operand.hbm [shape: f32[1,256], index: 0, kind: input, shape index: {}]
  %s1 = inlined_call_operand.hbm [shape: f32[16,256], index: 1, kind: input, shape index: {}]
  %s2 = inlined_call_operand.hbm [shape: f32[16,256], index: 2, kind: output, shape index: {}]
  %s3 = sld [smem:[#allocation0]]
  $region49: #{tpu_custom_call.1} parent=0
    _
  %s5 = ssub.s32 1, %s3
  %s6 = scalar_select 0, %s5, %s3
  $region1: #{tpu_custom_call.1} parent=0
    #allocation2 [shape = 'u8[1024]{0}', space=vmem, size = 0x400, scoped, tag = 'input window, operand 0, single buffered']
    #allocation3 [shape = 's32[2]{0}', space=sflag, size = 0x8, scoped, tag = 'scoped memory for tpu_custom_call.1']
    #allocation4 [shape = 's32[2]{0}', space=sflag, size = 0x8, scoped, tag = 'scoped memory for tpu_custom_call.1']
    #allocation5 [shape = 'u8[16384]{0}', space=vmem, size = 0x4000, scoped, tag = 'input window, operand 1']
    #allocation6 [shape = 's32[2]{0}', space=sflag, size = 0x8, scoped, tag = 'scoped memory for tpu_custom_call.1']
    #allocation7 [shape = 'u8[16384]{0}', space=vmem, size = 0x4000, scoped, tag = 'output window, operand 0']
    %7 = vsyncpa [#allocation3], 0
    %8 = vsyncpa [#allocation6], 0
    %s9 = scalar_lea.sflag [#allocation6], 1
    %10 = vsyncpa %s9, 0
    %11 = vsyncpa [#allocation4], 0
    %s12 = scalar_lea.sflag [#allocation4], 1
    %13 = vsyncpa %s12, 0
    loop: start=0, step=1, limit=4
    $region2: #{tpu_custom_call.1} parent=1 // loop_pre_header
      _
    $region3: #{tpu_custom_call.1} parent=1 // loop_header
      %s15 = sphi 0, %s19
      %p16 = scmp.ge.s32.totalorder %s15, 4
      %s22 = sphi 0, %s34
      %s23 = sphi 0, %s30
      %s24 = sphi 0, %s22
      %s25 = sphi 0, %s23
      %s26 = sphi 0, %s24
      %s27 = sphi 0, %s25
      %s37 = sphi 0, %s39
      %s40 = sphi 0, %s37
      %s41 = sphi 0, %s40
      %s57 = sphi 0, %s41
      %s65 = sphi 0, %s67
      %s68 = sphi 0, %s65
      %s69 = sphi 0, %s68
      %s85 = sphi 0, %s69
      %s93 = sphi 0, %s95
      %s96 = sphi 0, %s93
      %s97 = sphi 0, %s96
      %s113 = sphi 0, %s97
    $region4: #{tpu_custom_call.1} parent=1 // loop_header_branch
      %18 = sbr.rel (%p16) target = $region8
    $region5: #{tpu_custom_call.1} parent=1 // loop_body
      %s20 = ssub.s32 %s15, 1
      %s21 = ssub.s32 %s15, 2
      %s28 = sadd.s32 1, %s23
      %p29 = scmp.ge.s32.totalorder %s28, 1
      %s30 = scalar_select %p29, 0, %s28
      %s31 = sadd.s32 1, %s22
      %s32 = scalar_select %p29, %s31, %s22
      %p33 = scmp.ge.s32.totalorder %s32, 2
      %s34 = scalar_select %p33, 0, %s32
      %s35 = ssub.s32 %s23, %s30
      %p36 = scmp.eq.s32.totalorder %s35, 0
      %s38 = sadd.s32 %s37, 1
      %s39 = scalar_select %p36, %s37, %s38
      %p42 = pneg %p36
      %p43 = scmp.eq.s32.totalorder %s15, 1
      %p44 = por %p42, %p43
      %p45 = scmp.ne.s32.totalorder %s37, %s40
      %p46 = scmp.eq.s32.totalorder %s15, 0
      %p47 = por %p45, %p46
      %p48 = scmp.ne.s32.totalorder %s37, %s40
      %p49 = scmp.eq.s32.totalorder %s20, 1
      %p50 = por %p48, %p49
      %p51 = scmp.ne.s32.totalorder %s40, %s41
      %p52 = scmp.eq.s32.totalorder %s20, 0
      %p53 = por %p51, %p52
      %p54 = scmp.ne.s32.totalorder %s40, %s41
      %p55 = scmp.eq.s32.totalorder %s21, 1
      %p56 = por %p54, %p55
      %p58 = scmp.ne.s32.totalorder %s41, %s57
      %p59 = scmp.eq.s32.totalorder %s21, 0
      %p60 = por %p58, %p59
      %s61 = ssub.s32 %s22, %s34
      %s62 = ssub.s32 %s23, %s30
      %s63 = sor.u32 %s61, %s62
      %p64 = scmp.eq.s32.totalorder %s63, 0
      %s66 = sadd.s32 %s65, 1
      %s67 = scalar_select %p64, %s65, %s66
      %p70 = pneg %p64
      %p71 = scmp.eq.s32.totalorder %s15, 1
      %p72 = por %p70, %p71
      %p73 = scmp.ne.s32.totalorder %s65, %s68
      %p74 = scmp.eq.s32.totalorder %s15, 0
      %p75 = por %p73, %p74
      %p76 = scmp.ne.s32.totalorder %s65, %s68
      %p77 = scmp.eq.s32.totalorder %s20, 1
      %p78 = por %p76, %p77
      %p79 = scmp.ne.s32.totalorder %s68, %s69
      %p80 = scmp.eq.s32.totalorder %s20, 0
      %p81 = por %p79, %p80
      %p82 = scmp.ne.s32.totalorder %s68, %s69
      %p83 = scmp.eq.s32.totalorder %s21, 1
      %p84 = por %p82, %p83
      %p86 = scmp.ne.s32.totalorder %s69, %s85
      %p87 = scmp.eq.s32.totalorder %s21, 0
      %p88 = por %p86, %p87
      %s89 = ssub.s32 %s22, %s34
      %s90 = ssub.s32 %s23, %s30
      %s91 = sor.u32 %s89, %s90
      %p92 = scmp.eq.s32.totalorder %s91, 0
      %s94 = sadd.s32 %s93, 1
      %s95 = scalar_select %p92, %s93, %s94
      %p98 = pneg %p92
      %p99 = scmp.eq.s32.totalorder %s15, 1
      %p100 = por %p98, %p99
      %p101 = scmp.ne.s32.totalorder %s93, %s96
      %p102 = scmp.eq.s32.totalorder %s15, 0
      %p103 = por %p101, %p102
      %p104 = scmp.ne.s32.totalorder %s93, %s96
      %p105 = scmp.eq.s32.totalorder %s20, 1
      %p106 = por %p104, %p105
      %p107 = scmp.ne.s32.totalorder %s96, %s97
      %p108 = scmp.eq.s32.totalorder %s20, 0
      %p109 = por %p107, %p108
      %p110 = scmp.ne.s32.totalorder %s96, %s97
      %p111 = scmp.eq.s32.totalorder %s21, 1
      %p112 = por %p110, %p111
      %p114 = scmp.ne.s32.totalorder %s97, %s113
      %p115 = scmp.eq.s32.totalorder %s21, 0
      %p116 = por %p114, %p115
      %p117 = scmp.le.s32.totalorder 1, %s15
      %p118 = scmp.lt.s32.totalorder %s15, 3
      %p119 = pnand %p117, %p118
      %p120 = pneg %p119
      // Predicated region
      $region9: #{tpu_custom_call.1} parent=5 // pred_check
        _
      $region10: #{tpu_custom_call.1} parent=5 // pred_check_branch
        %122 = sbr.rel (%p119) target = $region12
      $region11: #{tpu_custom_call.1} parent=5 // pred_region
        %s123 = ssub.s32 %s15, 1
        // Predicated region
        $region13: #{tpu_custom_call.1} parent=11 // pred_check
          %p124 = pneg %p53
        $region14: #{tpu_custom_call.1} parent=11 // pred_check_branch
          %126 = sbr.rel (%p124) target = $region16
        $region15: #{tpu_custom_call.1} parent=11 // pred_region
          %s127 = smul.u32 2, %s25
          %s129 = ssub.s32 32, 32
          %130 = vsyncadd [#allocation3], %s129
          %s131 = smul.addr %s127, 16
          %s132 = scalar_lea.hbm %s0, %s131
          %s134 = sshll.u32 [#allocation2], 4
          %s135 = int_to_ptr.vmem [resolvable:$true] %s134
          %137 = dma.hbm_to_vmem [thread:$0]  %s132, 32, %s135, [#allocation3]
        $region16: #{tpu_custom_call.1} parent=11 // pred_fallthru
          _
      $region12: #{tpu_custom_call.1} parent=5 // pred_fallthru
        _
      %p138 = scmp.lt.s32.totalorder %s15, 2
      // Predicated region
      $region17: #{tpu_custom_call.1} parent=5 // pred_check
        %p139 = pneg %p138
      $region18: #{tpu_custom_call.1} parent=5 // pred_check_branch
        %141 = sbr.rel (%p139) target = $region20
      $region19: #{tpu_custom_call.1} parent=5 // pred_region
        // Predicated region
        $region21: #{tpu_custom_call.1} parent=19 // pred_check
          %p142 = pneg %p75
        $region22: #{tpu_custom_call.1} parent=19 // pred_check_branch
          %144 = sbr.rel (%p142) target = $region24
        $region23: #{tpu_custom_call.1} parent=19 // pred_region
          %s145 = sand.u32 %s65, 1
          %s146 = scalar_lea.sflag [#allocation6], %s145
          %s147 = sand.u32 %s65, 1
          %s148 = smul.addr %s147, 16
          %s149 = scalar_lea.vmem [#allocation5], %s148
          %s150 = smul.u32 2, %s23
          %s152 = ssub.s32 256, 256
          %153 = vsyncadd %s146, %s152
          %s154 = smul.addr %s22, 2
          %s155 = sadd.s32 %s150, %s154
          %s156 = smul.addr %s155, 128
          %s157 = scalar_lea.hbm %s1, %s156
          %s159 = sshll.u32 %s149, 4
          %s160 = int_to_ptr.vmem [resolvable:$true] %s159
          %162 = dma.hbm_to_vmem [thread:$0]  %s157, 256, %s160, %s146
        $region24: #{tpu_custom_call.1} parent=19 // pred_fallthru
          _
      $region20: #{tpu_custom_call.1} parent=5 // pred_fallthru
        _
      %p163 = scmp.le.s32.totalorder 1, %s15
      %p164 = scmp.lt.s32.totalorder %s15, 3
      %p165 = pnand %p163, %p164
      %p166 = pneg %p165
      // Predicated region
      $region25: #{tpu_custom_call.1} parent=5 // pred_check
        _
      $region26: #{tpu_custom_call.1} parent=5 // pred_check_branch
        %168 = sbr.rel (%p165) target = $region28
      $region27: #{tpu_custom_call.1} parent=5 // pred_region
        %s169 = ssub.s32 %s15, 1
        // Predicated region
        $region29: #{tpu_custom_call.1} parent=27 // pred_check
          %p170 = pneg %p53
        $region30: #{tpu_custom_call.1} parent=27 // pred_check_branch
          %172 = sbr.rel (%p170) target = $region32
        $region31: #{tpu_custom_call.1} parent=27 // pred_region
          %173 = dma.done [#allocation3], 32
        $region32: #{tpu_custom_call.1} parent=27 // pred_fallthru
          _
        %s174 = sand.u32 %s68, 1
        %s175 = scalar_lea.sflag [#allocation6], %s174
        %s176 = sand.u32 %s68, 1
        %s177 = smul.addr %s176, 16
        %s178 = scalar_lea.vmem [#allocation5], %s177
        // Predicated region
        $region33: #{tpu_custom_call.1} parent=27 // pred_check
          %p179 = pneg %p81
        $region34: #{tpu_custom_call.1} parent=27 // pred_check_branch
          %181 = sbr.rel (%p179) target = $region36
        $region35: #{tpu_custom_call.1} parent=27 // pred_region
          %182 = dma.done %s175, 256
        $region36: #{tpu_custom_call.1} parent=27 // pred_fallthru
          _
        %p183 = pneg %p53
        %p184 = pneg %p50
        %s185 = sand.u32 %s68, 1
        %s186 = scalar_lea.sflag [#allocation6], %s185
        %s187 = sand.u32 %s68, 1
        %s188 = smul.addr %s187, 16
        %s189 = scalar_lea.vmem [#allocation5], %s188
        %p190 = pneg %p81
        %p191 = pneg %p78
        %p192 = pneg %p109
        %p193 = pneg %p106
        %s194 = sand.u32 %s96, 1
        %s195 = scalar_lea.sflag [#allocation4], %s194
        %s196 = sand.u32 %s96, 1
        %s197 = smul.addr %s196, 16
        %s198 = scalar_lea.vmem [#allocation7], %s197
        %s199 = smul.u32 2, %s25
        %s200 = smul.u32 2, %s25
        %s201 = smul.u32 2, %s25
        %v202 = vld [vmem:[#allocation2] sm:$0x3]
        %v203 = vld [vmem:[%s178] sm:$0xff]
        %v204 = vld [vmem:[%s178 + $0x8] sm:$0xff]
        %v206 = vlaneseq
        %v207 = vshrl.u32 %v206, 7
        %v208 = vsub.s32 0, %v207
        %v209 = vrot.slane %v202, %v208
        %v210 = vlaneseq
        %v211 = vshrl.u32 %v210, 7
        %v212 = vsub.s32 1, %v211
        %v213 = vrot.slane %v202, %v212
        %v216 = vmul.f32 %v209, %v203
        %v217 = vmul.f32 %v213, %v204
        %v218 = vmax.f32 %v216, 0.0
        %v219 = vmax.f32 %v217, 0.0
        %220 = vst [vmem:[%s198] sm:$0xff] %v218
        %221 = vst [vmem:[%s198 + $0x8] sm:$0xff] %v219
        %s222 = sand.u32 %s96, 1
        %s223 = scalar_lea.sflag [#allocation4], %s222
        %s224 = sand.u32 %s96, 1
        %s225 = smul.addr %s224, 16
        %s226 = scalar_lea.vmem [#allocation7], %s225
        // Predicated region
        $region37: #{tpu_custom_call.1} parent=27 // pred_check
          %p227 = pneg %p106
        $region38: #{tpu_custom_call.1} parent=27 // pred_check_branch
          %229 = sbr.rel (%p227) target = $region40
        $region39: #{tpu_custom_call.1} parent=27 // pred_region
          %s230 = smul.u32 2, %s25
          %s232 = ssub.s32 256, 256
          %233 = vsyncadd %s223, %s232
          %s234 = smul.addr %s24, 2
          %s235 = sadd.s32 %s230, %s234
          %s236 = smul.addr %s235, 128
          %s237 = scalar_lea.hbm %s2, %s236
          %s239 = sshll.u32 %s226, 4
          %s240 = int_to_ptr.vmem [resolvable:$true] %s239
          %242 = dma.vmem_to_hbm [thread:$0]  %s240, 256, %s237, %s223
        $region40: #{tpu_custom_call.1} parent=27 // pred_fallthru
          _
      $region28: #{tpu_custom_call.1} parent=5 // pred_fallthru
        _
      %p243 = scmp.le.s32.totalorder 2, %s15
      // Predicated region
      $region41: #{tpu_custom_call.1} parent=5 // pred_check
        %p244 = pneg %p243
      $region42: #{tpu_custom_call.1} parent=5 // pred_check_branch
        %246 = sbr.rel (%p244) target = $region44
      $region43: #{tpu_custom_call.1} parent=5 // pred_region
        %s247 = ssub.s32 %s15, 2
        // Predicated region
        $region45: #{tpu_custom_call.1} parent=43 // pred_check
          %p248 = pneg %p112
        $region46: #{tpu_custom_call.1} parent=43 // pred_check_branch
          %250 = sbr.rel (%p248) target = $region48
        $region47: #{tpu_custom_call.1} parent=43 // pred_region
          %s251 = sand.u32 %s97, 1
          %s252 = scalar_lea.sflag [#allocation4], %s251
          %s253 = sand.u32 %s97, 1
          %s254 = smul.addr %s253, 16
          %s255 = scalar_lea.vmem [#allocation7], %s254
          %256 = dma.done %s252, 256
        $region48: #{tpu_custom_call.1} parent=43 // pred_fallthru
          _
      $region44: #{tpu_custom_call.1} parent=5 // pred_fallthru
        _
    $region6: #{tpu_custom_call.1} parent=1 // loop_footer
      %s19 = sadd.s32 1, %s15
    $region7: #{tpu_custom_call.1} parent=1 // loop_footer_branch
      %14 = sbr.rel target = $region3
    $region8: #{tpu_custom_call.1} parent=1 // loop_exit
      _
    %257 = vsyncpa [#allocation3], 1
    %s258 = scalar_lea.sflag [#allocation3], 1
    %259 = vsyncpa %s258, 1
    %260 = vsyncpa [#allocation6], 1
    %s261 = scalar_lea.sflag [#allocation6], 1
    %262 = vsyncpa %s261, 1
    %263 = vsyncpa [#allocation4], 1
    %s264 = scalar_lea.sflag [#allocation4], 1
    %265 = vsyncpa %s264, 1

</llo_original>
